<compile_context>
chip_gen: v7x
topology: tpu7x:2x2x1
jax: 0.10.0
libtpu: 0.0.40
codegen_flags: <defaults>
</compile_context>

<pallas_src>
import functools

import jax
import jax.numpy as jnp
from jax import lax
from jax.experimental import pallas as pl
from jax.experimental.pallas import tpu as pltpu


# ----------------------------------------------------------------------------
# Pallas kernels
# ----------------------------------------------------------------------------
def _conv1x1_kernel(x_ref, w_ref, scale_ref, bias_ref, o_ref, *, slope):
    # x: (1, Cin, TM)  w: (Cout, Cin)  scale/bias: (Cout, 1)  o: (1, Cout, TM)
    y = jnp.dot(w_ref[...], x_ref[0], preferred_element_type=jnp.float32)
    y = y * scale_ref[...] + bias_ref[...]
    o_ref[0] = jnp.where(y >= 0.0, y, slope * y)


def _merge3x3_kernel(xf_ref, xc_ref, u_ref, w_ref, scale_ref, bias_ref,
                     o_ref, xpad_ref, *, H, W, pad, slope):
    # xf: (1, C, H*W) fine map   xc: (1, C, Hc*Wc) coarse map
    # u : (Hc*Wc, H*W) nearest-upsample 0/1 matrix
    # w : (Cout, 9*C) packed 3x3 weights   scale/bias: (Cout, 1)
    # xpad (scratch): (C, H*W + 2*pad) zero-padded fused input
    HW = H * W

    # Fused nearest-upsample (MXU matmul) + elementwise add, all in f32.
    x = xf_ref[0] + jnp.dot(xc_ref[0], u_ref[...],
                            preferred_element_type=jnp.float32)      # (C, HW)

    # Zero-padded copy in VMEM: handles the conv's 1-pixel halo in-kernel
    # (no jnp.pad HBM pass).  Re-zeroed every step (cheap, megacore-safe).
    xpad_ref[...] = jnp.zeros_like(xpad_ref)
    xpad_ref[:, pad:pad + HW] = x

    # Flattened (h, w) coordinates of every output position, for border masks.
    pos = lax.broadcasted_iota(jnp.int32, (1, HW), 1)
    hh = pos // W
    ww = pos % W

    # im2col: 9 shifted+masked views stacked to (9*C, HW) -> one K=9*C matmul.
    patches = []
    for dh in (-1, 0, 1):
        for dw in (-1, 0, 1):
            off = dh * W + dw
            shifted = xpad_ref[:, pad + off:pad + off + HW]           # (C, HW)
            valid = ((hh + dh >= 0) & (hh + dh < H) &
                     (ww + dw >= 0) & (ww + dw < W))
            patches.append(jnp.where(valid, shifted, 0.0))
    p = jnp.concatenate(patches, axis=0)                              # (9C, HW)

    y = jnp.dot(w_ref[...], p, preferred_element_type=jnp.float32)   # (Cout,HW)
    y = y * scale_ref[...] + bias_ref[...]
    o_ref[0] = jnp.where(y >= 0.0, y, slope * y)


# ----------------------------------------------------------------------------
# pallas_call wrappers
# ----------------------------------------------------------------------------
def _pick_spatial_tile(m, max_tile=1024):
    """Largest lane-aligned spatial tile (keeps full extent at small sizes)."""
    if m <= max_tile or m % 128 != 0:
        return m
    for t in (max_tile, 512, 256, 128):
        if m % t == 0:
            return t
    return m


def conv1x1_bn_lrelu(x, w_t, scale, bias, slope):
    # x: (N, Cin, HW)   w_t: (Cout, Cin)   scale/bias: (Cout, 1)
    N, Cin, HW = x.shape
    Cout = w_t.shape[0]
    TM = _pick_spatial_tile(HW)
    grid = (N, HW // TM)
    return pl.pallas_call(
        functools.partial(_conv1x1_kernel, slope=slope),
        out_shape=jax.ShapeDtypeStruct((N, Cout, HW), jnp.float32),
        grid=grid,
        in_specs=[
            pl.BlockSpec((1, Cin, TM), lambda n, j: (n, 0, j)),
            pl.BlockSpec((Cout, Cin), lambda n, j: (0, 0)),
            pl.BlockSpec((Cout, 1), lambda n, j: (0, 0)),
            pl.BlockSpec((Cout, 1), lambda n, j: (0, 0)),
        ],
        out_specs=pl.BlockSpec((1, Cout, TM), lambda n, j: (n, 0, j)),
        compiler_params=pltpu.CompilerParams(
            dimension_semantics=("parallel", "parallel")),
    )(x, w_t, scale, bias)


def merge3x3_bn_lrelu(x_fine, x_coarse, u, w2, scale, bias, slope, H, W):
    # x_fine: (N, C, H*W)  x_coarse: (N, C, Hc*Wc)  u: (Hc*Wc, H*W)
    # w2: (Cout, 9*C)
    N, C, HW = x_fine.shape
    HcWc = x_coarse.shape[2]
    Cout = w2.shape[0]
    pad = max(128, W + 1)                 # left/right zero halo in the scratch
    return pl.pallas_call(
        functools.partial(_merge3x3_kernel, H=H, W=W, pad=pad, slope=slope),
        out_shape=jax.ShapeDtypeStruct((N, Cout, HW), jnp.float32),
        grid=(N,),
        in_specs=[
            pl.BlockSpec((1, C, HW), lambda n: (n, 0, 0)),
            pl.BlockSpec((1, C, HcWc), lambda n: (n, 0, 0)),
            pl.BlockSpec((HcWc, HW), lambda n: (0, 0)),
            pl.BlockSpec((Cout, 9 * C), lambda n: (0, 0)),
            pl.BlockSpec((Cout, 1), lambda n: (0, 0)),
            pl.BlockSpec((Cout, 1), lambda n: (0, 0)),
        ],
        out_specs=pl.BlockSpec((1, Cout, HW), lambda n: (n, 0, 0)),
        scratch_shapes=[pltpu.VMEM((C, HW + 2 * pad), jnp.float32)],
        compiler_params=pltpu.CompilerParams(
            dimension_semantics=("parallel",)),
    )(x_fine, x_coarse, u, w2, scale, bias)


def _nearest_upsample_matrix(hc, wc, h, w):
    # PyTorch F.interpolate(mode='nearest'): src = floor(dst * in / out).
    hi = (jnp.arange(h) * hc) // h
    wi = (jnp.arange(w) * wc) // w
    src = (hi[:, None] * wc + wi[None, :]).reshape(-1)                # (h*w,)
    return (jnp.arange(hc * wc)[:, None] == src[None, :]).astype(jnp.float32)


# ----------------------------------------------------------------------------
# Parameter construction (deterministic, synthetic)
# ----------------------------------------------------------------------------
def _fold_bn(gamma, beta, mean, var, eps=1e-5):
    scale = gamma / jnp.sqrt(var + eps)
    bias = beta - mean * scale
    return scale, bias


def _make_convmodule_params(key, cin, cout, ksize):
    kw, kg, kb, km, kv = jax.random.split(key, 5)
    if ksize == 1:
        w = jax.random.normal(kw, (cin, cout), jnp.float32) * 0.1
    else:                                       # HWIO
        w = jax.random.normal(kw, (ksize, ksize, cin, cout), jnp.float32) * 0.1
    gamma = 1.0 + 0.1 * jax.random.normal(kg, (cout,), jnp.float32)
    beta = 0.1 * jax.random.normal(kb, (cout,), jnp.float32)
    mean = 0.1 * jax.random.normal(km, (cout,), jnp.float32)
    var = jax.random.uniform(kv, (cout,), jnp.float32, minval=0.5, maxval=1.5)
    scale, bias = _fold_bn(gamma, beta, mean, var)
    return (w, scale, bias)


def make_neck_params(key, in_channels, out_channels):
    ks = jax.random.split(key, 5)
    return {
        "output1": _make_convmodule_params(ks[0], in_channels[0], out_channels, 1),
        "output2": _make_convmodule_params(ks[1], in_channels[1], out_channels, 1),
        "output3": _make_convmodule_params(ks[2], in_channels[2], out_channels, 1),
        "merge1": _make_convmodule_params(ks[3], out_channels, out_channels, 3),
        "merge2": _make_convmodule_params(ks[4], out_channels, out_channels, 3),
    }


# ----------------------------------------------------------------------------
# Full neck forward (Pallas) and a pure-JAX reference
# ----------------------------------------------------------------------------
def _pack1x1(p):
    w, scale, bias = p                    # w: (Cin, Cout)
    return w.T, scale.reshape(-1, 1), bias.reshape(-1, 1)


def _pack3x3(p):
    w, scale, bias = p                    # w: HWIO (3, 3, Cin, Cout)
    cout = w.shape[3]
    w2 = jnp.transpose(w, (3, 0, 1, 2)).reshape(cout, -1)   # (Cout, 9*Cin)
    return w2, scale.reshape(-1, 1), bias.reshape(-1, 1)


def retinaface_neck_pallas(inputs_nchw, params, slope):
    shapes = [x.shape for x in inputs_nchw]
    # NCHW flattens to (N, C, H*W) for free -- no layout transposes.
    xs = [x.reshape(s[0], s[1], s[2] * s[3]) for x, s in zip(inputs_nchw, shapes)]

    o1 = conv1x1_bn_lrelu(xs[0], *_pack1x1(params["output1"]), slope)
    o2 = conv1x1_bn_lrelu(xs[1], *_pack1x1(params["output2"]), slope)
    o3 = conv1x1_bn_lrelu(xs[2], *_pack1x1(params["output3"]), slope)

    (_, _, H1, W1), (_, _, H2, W2), (_, _, H3, W3) = shapes
    u32 = _nearest_upsample_matrix(H3, W3, H2, W2)
    o2 = merge3x3_bn_lrelu(o2, o3, u32, *_pack3x3(params["merge2"]),
                           slope, H2, W2)
    u21 = _nearest_upsample_matrix(H2, W2, H1, W1)
    o1 = merge3x3_bn_lrelu(o1, o2, u21, *_pack3x3(params["merge1"]),
                           slope, H1, W1)

    outs = []
    for o, s in zip((o1, o2, o3), shapes):
        outs.append(o.reshape(s[0], o.shape[1], s[2], s[3]))   # back to NCHW
    return outs


def _ref_convmodule(x_nchw, w, scale, bias, slope, ksize):
    if ksize == 1:
        w_hwio = w.reshape(1, 1, *w.shape)
        padding = "VALID"
    else:
        w_hwio = w
        padding = "SAME"
    y = lax.conv_general_dilated(
        x_nchw, w_hwio, (1, 1), padding,
        dimension_numbers=("NCHW", "HWIO", "NCHW"))
    y = y * scale.reshape(1, -1, 1, 1) + bias.reshape(1, -1, 1, 1)
    return jnp.where(y >= 0.0, y, slope * y)


def _ref_upsample(x_nchw, h, w):
    hi = (jnp.arange(h) * x_nchw.shape[2]) // h
    wi = (jnp.arange(w) * x_nchw.shape[3]) // w
    return x_nchw[:, :, hi][:, :, :, wi]


def retinaface_neck_ref(inputs_nchw, params, slope):
    o1 = _ref_convmodule(inputs_nchw[0], *params["output1"], slope, 1)
    o2 = _ref_convmodule(inputs_nchw[1], *params["output2"], slope, 1)
    o3 = _ref_convmodule(inputs_nchw[2], *params["output3"], slope, 1)
    up3 = _ref_upsample(o3, o2.shape[2], o2.shape[3])
    o2 = _ref_convmodule(o2 + up3, *params["merge2"], slope, 3)
    up2 = _ref_upsample(o2, o1.shape[2], o1.shape[3])
    o1 = _ref_convmodule(o1 + up2, *params["merge1"], slope, 3)
    return [o1, o2, o3]


# ----------------------------------------------------------------------------
if __name__ == "__main__":
    key = jax.random.PRNGKey(0)
    k_in, k_p = jax.random.split(key)

    in_channels = [8, 16, 32]
    out_channels = 8                      # <= 64 -> LeakyReLU slope 0.1
    slope = 0.1 if out_channels <= 64 else 0.0

    k1, k2, k3 = jax.random.split(k_in, 3)
    inputs = [
        jax.random.normal(k1, (2, in_channels[0], 16, 16), jnp.float32),
        jax.random.normal(k2, (2, in_channels[1], 8, 8), jnp.float32),
        jax.random.normal(k3, (2, in_channels[2], 4, 4), jnp.float32),
    ]
    params = make_neck_params(k_p, in_channels, out_channels)

    outs = retinaface_neck_pallas(inputs, params, slope)
    outs = [jax.block_until_ready(o) for o in outs]

    refs = retinaface_neck_ref(inputs, params, slope)
    for o, r in zip(outs, refs):
        assert o.shape == r.shape, (o.shape, r.shape)
        assert jnp.allclose(o, r, atol=1e-4, rtol=1e-4), "mismatch vs reference"

    print("KERNEL_OK")
</pallas_src>

<mosaic_0001>
module attributes {stable_mosaic.version = 11 : i64} {
  func.func @_conv1x1_kernel(%arg0: i32, %arg1: i32, %arg2: memref<1x8x256xf32, #tpu.memory_space<vmem>>, %arg3: memref<8x8xf32, #tpu.memory_space<vmem>>, %arg4: memref<8x1xf32, #tpu.memory_space<vmem>>, %arg5: memref<8x1xf32, #tpu.memory_space<vmem>>, %arg6: memref<1x8x256xf32, #tpu.memory_space<vmem>>) attributes {dimension_semantics = [#tpu.dimension_semantics<parallel>, #tpu.dimension_semantics<parallel>], iteration_bounds = array<i64: 2, 1>, scalar_prefetch = 0 : i64, scratch_operands = 0 : i64, tpu.core_type = #tpu.core_type<tc>, window_params = [{transform_indices = @transform_0, window_bounds = array<i64: 1, 8, 256>}, {pipeline_mode = #tpu.pipeline_mode<synchronous>, transform_indices = @transform_1, window_bounds = array<i64: 8, 8>}, {pipeline_mode = #tpu.pipeline_mode<synchronous>, transform_indices = @transform_2, window_bounds = array<i64: 8, 1>}, {pipeline_mode = #tpu.pipeline_mode<synchronous>, transform_indices = @transform_3, window_bounds = array<i64: 8, 1>}, {transform_indices = @transform_4, window_bounds = array<i64: 1, 8, 256>}]} {
    %c0 = arith.constant 0 : index
    %c0_0 = arith.constant 0 : index
    %0 = vector.load %arg3[%c0, %c0_0] : memref<8x8xf32, #tpu.memory_space<vmem>>, vector<8x8xf32>
    %c0_1 = arith.constant 0 : index
    %c0_2 = arith.constant 0 : index
    %c0_3 = arith.constant 0 : index
    %1 = vector.load %arg2[%c0_1, %c0_2, %c0_3] : memref<1x8x256xf32, #tpu.memory_space<vmem>>, vector<1x8x256xf32>
    %2 = vector.shape_cast %1 : vector<1x8x256xf32> to vector<8x256xf32>
    %cst = arith.constant dense<0.000000e+00> : vector<8x256xf32>
    %3 = tpu.matmul %0, %2, %cst {dimension_numbers = #tpu.dot_dimension_numbers<[1], [0], [0], [1], [0, 0, 1, 1], [], []>} : vector<8x8xf32>, vector<8x256xf32>, vector<8x256xf32> -> vector<8x256xf32>
    %c0_4 = arith.constant 0 : index
    %c0_5 = arith.constant 0 : index
    %4 = vector.load %arg4[%c0_4, %c0_5] : memref<8x1xf32, #tpu.memory_space<vmem>>, vector<8x1xf32>
    %5 = vector.broadcast %4 : vector<8x1xf32> to vector<8x256xf32>
    %6 = arith.mulf %3, %5 : vector<8x256xf32>
    %c0_6 = arith.constant 0 : index
    %c0_7 = arith.constant 0 : index
    %7 = vector.load %arg5[%c0_6, %c0_7] : memref<8x1xf32, #tpu.memory_space<vmem>>, vector<8x1xf32>
    %8 = vector.broadcast %7 : vector<8x1xf32> to vector<8x256xf32>
    %9 = arith.addf %6, %8 : vector<8x256xf32>
    %cst_8 = arith.constant 0.000000e+00 : f32
    %10 = vector.broadcast %cst_8 : f32 to vector<8x256xf32>
    %11 = arith.cmpf oge, %9, %10 : vector<8x256xf32>
    %cst_9 = arith.constant 1.000000e-01 : f32
    %12 = vector.broadcast %cst_9 : f32 to vector<8x256xf32>
    %13 = arith.mulf %12, %9 : vector<8x256xf32>
    %14 = arith.select %11, %9, %13 : vector<8x256xi1>, vector<8x256xf32>
    %c0_10 = arith.constant 0 : index
    %c0_11 = arith.constant 0 : index
    %c0_12 = arith.constant 0 : index
    %15 = vector.load %arg6[%c0_10, %c0_11, %c0_12] : memref<1x8x256xf32, #tpu.memory_space<vmem>>, vector<1x8x256xf32>
    %16 = vector.shape_cast %15 : vector<1x8x256xf32> to vector<8x256xf32>
    %17 = vector.shape_cast %14 : vector<8x256xf32> to vector<1x8x256xf32>
    tpu.vector_store %arg6[%c0_10, %c0_11, %c0_12], %17 {strides = array<i32>} : memref<1x8x256xf32, #tpu.memory_space<vmem>>, vector<1x8x256xf32>,
    return
  }
  func.func @transform_0(%arg0: i32, %arg1: i32) -> (i32, i32, i32) {
    %c0_i32 = arith.constant 0 : i32
    %c0_i32_0 = arith.constant 0 : i32
    return %arg0, %c0_i32, %arg1 : i32, i32, i32
  }
  func.func @transform_1(%arg0: i32, %arg1: i32) -> (i32, i32) {
    %c0_i32 = arith.constant 0 : i32
    %c0_i32_0 = arith.constant 0 : i32
    %c0_i32_1 = arith.constant 0 : i32
    return %c0_i32, %c0_i32_0 : i32, i32
  }
  func.func @transform_2(%arg0: i32, %arg1: i32) -> (i32, i32) {
    %c0_i32 = arith.constant 0 : i32
    %c0_i32_0 = arith.constant 0 : i32
    %c0_i32_1 = arith.constant 0 : i32
    return %c0_i32, %c0_i32_0 : i32, i32
  }
  func.func @transform_3(%arg0: i32, %arg1: i32) -> (i32, i32) {
    %c0_i32 = arith.constant 0 : i32
    %c0_i32_0 = arith.constant 0 : i32
    %c0_i32_1 = arith.constant 0 : i32
    return %c0_i32, %c0_i32_0 : i32, i32
  }
  func.func @transform_4(%arg0: i32, %arg1: i32) -> (i32, i32, i32) {
    %c0_i32 = arith.constant 0 : i32
    %c0_i32_0 = arith.constant 0 : i32
    return %arg0, %c0_i32, %arg1 : i32, i32, i32
  }
}

</mosaic_0001>

<llo_original>
// kernel: tpu_custom_call.1
$region0: #{tpu_custom_call.1}
  #allocation0 [shape = 'u32[]', space=smem, size = 0x4, offset = 0x4, fixed_abs, tag = 'smem constant byte address 0x4 - core index']
  #allocation1 [shape = 'u32[144,128]{1,0:T(1,128)}', space=vmem, size = 0x12000, scoped, tag = 'internal scratch']
  %s0 = inlined_call_operand.hbm [shape: f32[2,8,256], index: 0, kind: input, shape index: {}]
  %s1 = inlined_call_operand.vmem [shape: f32[8,8], index: 1, kind: input, shape index: {}]
  %s2 = inlined_call_operand.vmem [shape: f32[8,1], index: 2, kind: input, shape index: {}]
  %s3 = inlined_call_operand.vmem [shape: f32[8,1], index: 3, kind: input, shape index: {}]
  %s4 = inlined_call_operand.hbm [shape: f32[2,8,256], index: 4, kind: output, shape index: {}]
  %s5 = sld [smem:[#allocation0]]
  $region53: #{tpu_custom_call.1} parent=0
    _
  %s7 = ssub.s32 1, %s5
  %s8 = scalar_select 0, %s7, %s5
  $region1: #{tpu_custom_call.1} parent=0
    #allocation2 [shape = 'u8[16384]{0}', space=vmem, size = 0x4000, scoped, tag = 'input window, operand 0']
    #allocation3 [shape = 's32[2]{0}', space=sflag, size = 0x8, scoped, tag = 'scoped memory for tpu_custom_call.1']
    #allocation4 [shape = 's32[2]{0}', space=sflag, size = 0x8, scoped, tag = 'scoped memory for tpu_custom_call.1']
    #allocation5 [shape = 'u8[16384]{0}', space=vmem, size = 0x4000, scoped, tag = 'output window, operand 0']
    %9 = vsyncpa [#allocation3], 0
    %s10 = scalar_lea.sflag [#allocation3], 1
    %11 = vsyncpa %s10, 0
    %12 = vsyncpa [#allocation4], 0
    %s13 = scalar_lea.sflag [#allocation4], 1
    %14 = vsyncpa %s13, 0
    loop: start=0, step=1, limit=4
    $region2: #{tpu_custom_call.1} parent=1 // loop_pre_header
      _
    $region3: #{tpu_custom_call.1} parent=1 // loop_header
      %s16 = sphi 0, %s20
      %p17 = scmp.ge.s32.totalorder %s16, 4
      %s23 = sphi 0, %s35
      %s24 = sphi 0, %s31
      %s25 = sphi 0, %s23
      %s26 = sphi 0, %s24
      %s27 = sphi 0, %s25
      %s28 = sphi 0, %s26
      %s40 = sphi 0, %s42
      %s43 = sphi 0, %s40
      %s44 = sphi 0, %s43
      %s60 = sphi 0, %s44
      %s64 = sphi 0, %s64
      %s66 = sphi 0, %s64
      %s67 = sphi 0, %s66
      %s81 = sphi 0, %s67
      %s85 = sphi 0, %s85
      %s87 = sphi 0, %s85
      %s88 = sphi 0, %s87
      %s102 = sphi 0, %s88
      %s106 = sphi 0, %s106
      %s108 = sphi 0, %s106
      %s109 = sphi 0, %s108
      %s123 = sphi 0, %s109
      %s131 = sphi 0, %s133
      %s134 = sphi 0, %s131
      %s135 = sphi 0, %s134
      %s151 = sphi 0, %s135
    $region4: #{tpu_custom_call.1} parent=1 // loop_header_branch
      %19 = sbr.rel (%p17) target = $region8
    $region5: #{tpu_custom_call.1} parent=1 // loop_body
      %s21 = ssub.s32 %s16, 1
      %s22 = ssub.s32 %s16, 2
      %s29 = sadd.s32 1, %s24
      %p30 = scmp.ge.s32.totalorder %s29, 1
      %s31 = scalar_select %p30, 0, %s29
      %s32 = sadd.s32 1, %s23
      %s33 = scalar_select %p30, %s32, %s23
      %p34 = scmp.ge.s32.totalorder %s33, 2
      %s35 = scalar_select %p34, 0, %s33
      %s36 = ssub.s32 %s23, %s35
      %s37 = ssub.s32 %s24, %s31
      %s38 = sor.u32 %s36, %s37
      %p39 = scmp.eq.s32.totalorder %s38, 0
      %s41 = sadd.s32 %s40, 1
      %s42 = scalar_select %p39, %s40, %s41
      %p45 = pneg %p39
      %p46 = scmp.eq.s32.totalorder %s16, 1
      %p47 = por %p45, %p46
      %p48 = scmp.ne.s32.totalorder %s40, %s43
      %p49 = scmp.eq.s32.totalorder %s16, 0
      %p50 = por %p48, %p49
      %p51 = scmp.ne.s32.totalorder %s40, %s43
      %p52 = scmp.eq.s32.totalorder %s21, 1
      %p53 = por %p51, %p52
      %p54 = scmp.ne.s32.totalorder %s43, %s44
      %p55 = scmp.eq.s32.totalorder %s21, 0
      %p56 = por %p54, %p55
      %p57 = scmp.ne.s32.totalorder %s43, %s44
      %p58 = scmp.eq.s32.totalorder %s22, 1
      %p59 = por %p57, %p58
      %p61 = scmp.ne.s32.totalorder %s44, %s60
      %p62 = scmp.eq.s32.totalorder %s22, 0
      %p63 = por %p61, %p62
      %s65 = sadd.s32 %s64, 1
      %p68 = scmp.eq.s32.totalorder %s16, 1
      %p69 = scmp.ne.s32.totalorder %s64, %s66
      %p70 = scmp.eq.s32.totalorder %s16, 0
      %p71 = por %p69, %p70
      %p72 = scmp.ne.s32.totalorder %s64, %s66
      %p73 = scmp.eq.s32.totalorder %s21, 1
      %p74 = por %p72, %p73
      %p75 = scmp.ne.s32.totalorder %s66, %s67
      %p76 = scmp.eq.s32.totalorder %s21, 0
      %p77 = por %p75, %p76
      %p78 = scmp.ne.s32.totalorder %s66, %s67
      %p79 = scmp.eq.s32.totalorder %s22, 1
      %p80 = por %p78, %p79
      %p82 = scmp.ne.s32.totalorder %s67, %s81
      %p83 = scmp.eq.s32.totalorder %s22, 0
      %p84 = por %p82, %p83
      %s86 = sadd.s32 %s85, 1
      %p89 = scmp.eq.s32.totalorder %s16, 1
      %p90 = scmp.ne.s32.totalorder %s85, %s87
      %p91 = scmp.eq.s32.totalorder %s16, 0
      %p92 = por %p90, %p91
      %p93 = scmp.ne.s32.totalorder %s85, %s87
      %p94 = scmp.eq.s32.totalorder %s21, 1
      %p95 = por %p93, %p94
      %p96 = scmp.ne.s32.totalorder %s87, %s88
      %p97 = scmp.eq.s32.totalorder %s21, 0
      %p98 = por %p96, %p97
      %p99 = scmp.ne.s32.totalorder %s87, %s88
      %p100 = scmp.eq.s32.totalorder %s22, 1
      %p101 = por %p99, %p100
      %p103 = scmp.ne.s32.totalorder %s88, %s102
      %p104 = scmp.eq.s32.totalorder %s22, 0
      %p105 = por %p103, %p104
      %s107 = sadd.s32 %s106, 1
      %p110 = scmp.eq.s32.totalorder %s16, 1
      %p111 = scmp.ne.s32.totalorder %s106, %s108
      %p112 = scmp.eq.s32.totalorder %s16, 0
      %p113 = por %p111, %p112
      %p114 = scmp.ne.s32.totalorder %s106, %s108
      %p115 = scmp.eq.s32.totalorder %s21, 1
      %p116 = por %p114, %p115
      %p117 = scmp.ne.s32.totalorder %s108, %s109
      %p118 = scmp.eq.s32.totalorder %s21, 0
      %p119 = por %p117, %p118
      %p120 = scmp.ne.s32.totalorder %s108, %s109
      %p121 = scmp.eq.s32.totalorder %s22, 1
      %p122 = por %p120, %p121
      %p124 = scmp.ne.s32.totalorder %s109, %s123
      %p125 = scmp.eq.s32.totalorder %s22, 0
      %p126 = por %p124, %p125
      %s127 = ssub.s32 %s23, %s35
      %s128 = ssub.s32 %s24, %s31
      %s129 = sor.u32 %s127, %s128
      %p130 = scmp.eq.s32.totalorder %s129, 0
      %s132 = sadd.s32 %s131, 1
      %s133 = scalar_select %p130, %s131, %s132
      %p136 = pneg %p130
      %p137 = scmp.eq.s32.totalorder %s16, 1
      %p138 = por %p136, %p137
      %p139 = scmp.ne.s32.totalorder %s131, %s134
      %p140 = scmp.eq.s32.totalorder %s16, 0
      %p141 = por %p139, %p140
      %p142 = scmp.ne.s32.totalorder %s131, %s134
      %p143 = scmp.eq.s32.totalorder %s21, 1
      %p144 = por %p142, %p143
      %p145 = scmp.ne.s32.totalorder %s134, %s135
      %p146 = scmp.eq.s32.totalorder %s21, 0
      %p147 = por %p145, %p146
      %p148 = scmp.ne.s32.totalorder %s134, %s135
      %p149 = scmp.eq.s32.totalorder %s22, 1
      %p150 = por %p148, %p149
      %p152 = scmp.ne.s32.totalorder %s135, %s151
      %p153 = scmp.eq.s32.totalorder %s22, 0
      %p154 = por %p152, %p153
      %p155 = scmp.le.s32.totalorder 1, %s16
      %p156 = scmp.lt.s32.totalorder %s16, 3
      %p157 = pnand %p155, %p156
      %p158 = pneg %p157
      // Predicated region
      $region9: #{tpu_custom_call.1} parent=5 // pred_check
        _
      $region10: #{tpu_custom_call.1} parent=5 // pred_check_branch
        %160 = sbr.rel (%p157) target = $region12
      $region11: #{tpu_custom_call.1} parent=5 // pred_region
        %s161 = ssub.s32 %s16, 1
        // Predicated region
        $region13: #{tpu_custom_call.1} parent=11 // pred_check
          %p162 = pneg %p77
        $region14: #{tpu_custom_call.1} parent=11 // pred_check_branch
          %164 = sbr.rel (%p162) target = $region16
        $region15: #{tpu_custom_call.1} parent=11 // pred_region
          _
        $region16: #{tpu_custom_call.1} parent=11 // pred_fallthru
          _
        // Predicated region
        $region17: #{tpu_custom_call.1} parent=11 // pred_check
          %p165 = pneg %p98
        $region18: #{tpu_custom_call.1} parent=11 // pred_check_branch
          %167 = sbr.rel (%p165) target = $region20
        $region19: #{tpu_custom_call.1} parent=11 // pred_region
          _
        $region20: #{tpu_custom_call.1} parent=11 // pred_fallthru
          _
        // Predicated region
        $region21: #{tpu_custom_call.1} parent=11 // pred_check
          %p168 = pneg %p119
        $region22: #{tpu_custom_call.1} parent=11 // pred_check_branch
          %170 = sbr.rel (%p168) target = $region24
        $region23: #{tpu_custom_call.1} parent=11 // pred_region
          _
        $region24: #{tpu_custom_call.1} parent=11 // pred_fallthru
          _
      $region12: #{tpu_custom_call.1} parent=5 // pred_fallthru
        _
      %p171 = scmp.lt.s32.totalorder %s16, 2
      // Predicated region
      $region25: #{tpu_custom_call.1} parent=5 // pred_check
        %p172 = pneg %p171
      $region26: #{tpu_custom_call.1} parent=5 // pred_check_branch
        %174 = sbr.rel (%p172) target = $region28
      $region27: #{tpu_custom_call.1} parent=5 // pred_region
        // Predicated region
        $region29: #{tpu_custom_call.1} parent=27 // pred_check
          %p175 = pneg %p50
        $region30: #{tpu_custom_call.1} parent=27 // pred_check_branch
          %177 = sbr.rel (%p175) target = $region32
        $region31: #{tpu_custom_call.1} parent=27 // pred_region
          %s178 = sand.u32 %s40, 1
          %s179 = scalar_lea.sflag [#allocation3], %s178
          %s180 = sand.u32 %s40, 1
          %s181 = smul.addr %s180, 16
          %s182 = scalar_lea.vmem [#allocation2], %s181
          %s183 = smul.u32 2, %s24
          %s185 = ssub.s32 256, 256
          %186 = vsyncadd %s179, %s185
          %s187 = smul.addr %s23, 2
          %s188 = sadd.s32 %s183, %s187
          %s189 = smul.addr %s188, 128
          %s190 = scalar_lea.hbm %s0, %s189
          %s192 = sshll.u32 %s182, 4
          %s193 = int_to_ptr.vmem [resolvable:$true] %s192
          %195 = dma.hbm_to_vmem [thread:$0]  %s190, 256, %s193, %s179
        $region32: #{tpu_custom_call.1} parent=27 // pred_fallthru
          _
      $region28: #{tpu_custom_call.1} parent=5 // pred_fallthru
        _
      %p196 = scmp.le.s32.totalorder 1, %s16
      %p197 = scmp.lt.s32.totalorder %s16, 3
      %p198 = pnand %p196, %p197
      %p199 = pneg %p198
      // Predicated region
      $region33: #{tpu_custom_call.1} parent=5 // pred_check
        _
      $region34: #{tpu_custom_call.1} parent=5 // pred_check_branch
        %201 = sbr.rel (%p198) target = $region36
      $region35: #{tpu_custom_call.1} parent=5 // pred_region
        %s202 = ssub.s32 %s16, 1
        %s203 = sand.u32 %s43, 1
        %s204 = scalar_lea.sflag [#allocation3], %s203
        %s205 = sand.u32 %s43, 1
        %s206 = smul.addr %s205, 16
        %s207 = scalar_lea.vmem [#allocation2], %s206
        // Predicated region
        $region37: #{tpu_custom_call.1} parent=35 // pred_check
          %p208 = pneg %p56
        $region38: #{tpu_custom_call.1} parent=35 // pred_check_branch
          %210 = sbr.rel (%p208) target = $region40
        $region39: #{tpu_custom_call.1} parent=35 // pred_region
          %211 = dma.done %s204, 256
        $region40: #{tpu_custom_call.1} parent=35 // pred_fallthru
          _
        %s212 = sand.u32 %s43, 1
        %s213 = scalar_lea.sflag [#allocation3], %s212
        %s214 = sand.u32 %s43, 1
        %s215 = smul.addr %s214, 16
        %s216 = scalar_lea.vmem [#allocation2], %s215
        %p217 = pneg %p56
        %p218 = pneg %p53
        %p219 = pneg %p77
        %p220 = pneg %p74
        %p221 = pneg %p98
        %p222 = pneg %p95
        %p223 = pneg %p119
        %p224 = pneg %p116
        %p225 = pneg %p147
        %p226 = pneg %p144
        %s227 = sand.u32 %s134, 1
        %s228 = scalar_lea.sflag [#allocation4], %s227
        %s229 = sand.u32 %s134, 1
        %s230 = smul.addr %s229, 16
        %s231 = scalar_lea.vmem [#allocation5], %s230
        %s232 = smul.u32 2, %s26
        %s233 = smul.u32 2, %s26
        %v234 = vld [vmem:[%s1] sm:$0xff]
        %v235 = vld [vmem:[%s207] sm:$0xff]
        %v236 = vld [vmem:[%s207 + $0x8] sm:$0xff]
        %vm237 = vcmask 64512
        %v239 = vsel %vm237, %v234, 0
        %241 = vmatprep.subr.mxu0 %v236
        %242 = vmatpush1.msra.mxu0 %v235
        %243 = vmatprep.subr.mxu0 0.0
        %244 = vmatpush1.msra.mxu0 0.0
        %245 = vmatprep.subr.mxu0 0.0
        %246 = vmatpush1.msra.mxu0 0.0
        %247 = vmatprep.subr.mxu0 0.0
        %248 = vmatpush1.msra.mxu0 0.0
        %249 = vmatprep.subr.mxu0 0.0
        %250 = vmatpush1.msra.mxu0 0.0
        %251 = vmatprep.subr.mxu0 0.0
        %252 = vmatpush1.msra.mxu0 0.0
        %253 = vmatprep.subr.mxu0 0.0
        %254 = vmatpush1.msra.mxu0 0.0
        %255 = vmatprep.subr.mxu0 0.0
        %256 = vmatpush1.msra.mxu0 0.0
        %257 = vmatprep.subr.mxu0 0.0
        %258 = vmatpush1.msra.mxu0 0.0
        %259 = vmatprep.subr.mxu0 0.0
        %260 = vmatpush1.msra.mxu0 0.0
        %261 = vmatprep.subr.mxu0 0.0
        %262 = vmatpush1.msra.mxu0 0.0
        %263 = vmatprep.subr.mxu0 0.0
        %264 = vmatpush1.msra.mxu0 0.0
        %265 = vmatprep.subr.mxu0 0.0
        %266 = vmatpush1.msra.mxu0 0.0
        %267 = vmatprep.subr.mxu0 0.0
        %268 = vmatpush1.msra.mxu0 0.0
        %269 = vmatprep.subr.mxu0 0.0
        %270 = vmatpush1.msra.mxu0 0.0
        %271 = vmatprep.subr.mxu0 0.0
        %272 = vmatpush1.msra.mxu0 0.0
        %273 = vmatprep.subr.mxu0 0.0
        %274 = vmatpush1.msra.mxu0 0.0
        %275 = vmatprep.subr.mxu0 0.0
        %276 = vmatpush1.msra.mxu0 0.0
        %277 = vmatprep.subr.mxu0 0.0
        %278 = vmatpush1.msra.mxu0 0.0
        %279 = vmatprep.subr.mxu0 0.0
        %280 = vmatpush1.msra.mxu0 0.0
        %281 = vmatprep.subr.mxu0 0.0
        %282 = vmatpush1.msra.mxu0 0.0
        %283 = vmatprep.subr.mxu0 0.0
        %284 = vmatpush1.msra.mxu0 0.0
        %285 = vmatprep.subr.mxu0 0.0
        %286 = vmatpush1.msra.mxu0 0.0
        %287 = vmatprep.subr.mxu0 0.0
        %288 = vmatpush1.msra.mxu0 0.0
        %289 = vmatprep.subr.mxu0 0.0
        %290 = vmatpush1.msra.mxu0 0.0
        %291 = vmatprep.subr.mxu0 0.0
        %292 = vmatpush1.msra.mxu0 0.0
        %293 = vmatprep.subr.mxu0 0.0
        %294 = vmatpush1.msra.mxu0 0.0
        %295 = vmatprep.subr.mxu0 0.0
        %296 = vmatpush1.msra.mxu0 0.0
        %297 = vmatprep.subr.mxu0 0.0
        %298 = vmatpush1.msra.mxu0 0.0
        %299 = vmatprep.subr.mxu0 0.0
        %300 = vmatpush1.msra.mxu0 0.0
        %301 = vmatprep.subr.mxu0 0.0
        %302 = vmatpush1.msra.mxu0 0.0
        %303 = vmatprep.subr.mxu0 0.0
        %304 = vmatpush1.msra.mxu0 0.0
        %305 = vmatprep.mubr.f32.mxu0 0.0
        %306 = vmatmul.mubr.f32.gmra.mrb[0].mxu0 %v239
        %v307 = vpop.f32.mrb[0].mxu0
        %v308 = vadd.f32 0.0, %v307
        %v309 = vpop.f32.mrb[0].mxu0
        %v310 = vadd.f32 0.0, %v309
        %311 = vdwg.mxu0
        %v312 = vld [vmem:[%s2] sm:$0xff]
        %314 = vset.pattern.permute.xlu0 0
        %315 = vperm.xlu0 %314, %v312
        %v316 = vpop.permute.xlu0 %315
        %v318 = vmul.f32 %v308, %v316
        %v319 = vmul.f32 %v310, %v316
        %v320 = vld [vmem:[%s3] sm:$0xff]
        %322 = vset.pattern.permute.xlu0 0
        %323 = vperm.xlu0 %322, %v320
        %v324 = vpop.permute.xlu0 %323
        %v326 = vadd.f32 %v318, %v324
        %v327 = vadd.f32 %v319, %v324
        %vm328 = vcmp.ge.f32.partialorder %v326, 0.0
        %vm329 = vcmp.ge.f32.partialorder %v327, 0.0
        %v330 = vmul.f32 %v326, 0.1
        %v331 = vmul.f32 %v327, 0.1
        %v332 = vsel %vm328, %v326, %v330
        %v333 = vsel %vm329, %v327, %v331
        %334 = vst [vmem:[%s231] sm:$0xff] %v332
        %335 = vst [vmem:[%s231 + $0x8] sm:$0xff] %v333
        %s336 = sand.u32 %s134, 1
        %s337 = scalar_lea.sflag [#allocation4], %s336
        %s338 = sand.u32 %s134, 1
        %s339 = smul.addr %s338, 16
        %s340 = scalar_lea.vmem [#allocation5], %s339
        // Predicated region
        $region41: #{tpu_custom_call.1} parent=35 // pred_check
          %p341 = pneg %p144
        $region42: #{tpu_custom_call.1} parent=35 // pred_check_branch
          %343 = sbr.rel (%p341) target = $region44
        $region43: #{tpu_custom_call.1} parent=35 // pred_region
          %s344 = smul.u32 2, %s26
          %s346 = ssub.s32 256, 256
          %347 = vsyncadd %s337, %s346
          %s348 = smul.addr %s25, 2
          %s349 = sadd.s32 %s344, %s348
          %s350 = smul.addr %s349, 128
          %s351 = scalar_lea.hbm %s4, %s350
          %s353 = sshll.u32 %s340, 4
          %s354 = int_to_ptr.vmem [resolvable:$true] %s353
          %356 = dma.vmem_to_hbm [thread:$0]  %s354, 256, %s351, %s337
        $region44: #{tpu_custom_call.1} parent=35 // pred_fallthru
          _
      $region36: #{tpu_custom_call.1} parent=5 // pred_fallthru
        _
      %p357 = scmp.le.s32.totalorder 2, %s16
      // Predicated region
      $region45: #{tpu_custom_call.1} parent=5 // pred_check
        %p358 = pneg %p357
      $region46: #{tpu_custom_call.1} parent=5 // pred_check_branch
        %360 = sbr.rel (%p358) target = $region48
      $region47: #{tpu_custom_call.1} parent=5 // pred_region
        %s361 = ssub.s32 %s16, 2
        // Predicated region
        $region49: #{tpu_custom_call.1} parent=47 // pred_check
          %p362 = pneg %p150
        $region50: #{tpu_custom_call.1} parent=47 // pred_check_branch
          %364 = sbr.rel (%p362) target = $region52
        $region51: #{tpu_custom_call.1} parent=47 // pred_region
          %s365 = sand.u32 %s135, 1
          %s366 = scalar_lea.sflag [#allocation4], %s365
          %s367 = sand.u32 %s135, 1
          %s368 = smul.addr %s367, 16
          %s369 = scalar_lea.vmem [#allocation5], %s368
          %370 = dma.done %s366, 256
        $region52: #{tpu_custom_call.1} parent=47 // pred_fallthru
          _
      $region48: #{tpu_custom_call.1} parent=5 // pred_fallthru
        _
    $region6: #{tpu_custom_call.1} parent=1 // loop_footer
      %s20 = sadd.s32 1, %s16
    $region7: #{tpu_custom_call.1} parent=1 // loop_footer_branch
      %15 = sbr.rel target = $region3
    $region8: #{tpu_custom_call.1} parent=1 // loop_exit
      _
    %371 = vsyncpa [#allocation3], 1
    %s372 = scalar_lea.sflag [#allocation3], 1
    %373 = vsyncpa %s372, 1
    %374 = vsyncpa [#allocation4], 1
    %s375 = scalar_lea.sflag [#allocation4], 1
    %376 = vsyncpa %s375, 1

</llo_original>
